<compile_context>
chip_gen: v7x
topology: tpu7x:2x2x1
jax: 0.10.0
libtpu: 0.0.40
codegen_flags: <defaults>
</compile_context>

<pallas_src>
import functools

import jax
import jax.numpy as jnp
from jax import lax
from jax.experimental import pallas as pl
from jax.experimental.pallas import tpu as pltpu


def _qnet_kernel(s_ref, w1_ref, b1_ref, w2_ref, b2_ref, q_ref):
    # fc1: h = s @ W1^T + b1   (no activation, matching the PyTorch forward)
    s_bf = s_ref[...].astype(jnp.bfloat16)
    h = lax.dot_general(
        s_bf, w1_ref[...],                       # (TB, in) x (h, in) -> (TB, h)
        dimension_numbers=(((1,), (1,)), ((), ())),
        preferred_element_type=jnp.float32)
    h = h + b1_ref[...]                          # f32 epilogue; b1 is (1, h)

    # fc2: q = h @ W2^T + b2
    h_bf = h.astype(jnp.bfloat16)
    q = lax.dot_general(
        h_bf, w2_ref[...],                       # (TB, h) x (out, h) -> (TB, out)
        dimension_numbers=(((1,), (1,)), ((), ())),
        preferred_element_type=jnp.float32)
    q_ref[...] = (q + b2_ref[...]).astype(q_ref.dtype)


def prepare_qnet_params(w1, b1, w2, b2):
    """One-time conversion of PyTorch-layout nn.Linear params for the kernel.

    Weights are cast to bf16 here (NOT on every forward call) so the MXU gets
    bf16 inputs and HBM weight traffic is halved; no transposes are needed.
    """
    return (w1.astype(jnp.bfloat16),              # (h_dim, in_dim)
            b1.reshape(1, -1).astype(jnp.float32),  # (1, h_dim)
            w2.astype(jnp.bfloat16),              # (out_dim, h_dim)
            b2.reshape(1, -1).astype(jnp.float32))  # (1, out_dim)


def _vmem_budget_bytes(tb, in_dim, h_dim, out_dim):
    bf16, f32 = 2, 4
    resident = (h_dim * in_dim * bf16 + out_dim * h_dim * bf16
                + h_dim * f32 + out_dim * f32)          # weights + biases
    pipelined = 2 * tb * in_dim * f32 + 2 * tb * out_dim * f32  # double buffers
    working = tb * h_dim * (f32 + bf16) + tb * out_dim * f32    # intermediates
    need = resident + pipelined + working
    return int(min(max(2 * need, 16 * 1024 * 1024), 48 * 1024 * 1024))


@functools.partial(jax.jit, static_argnames=("block_b",))
def qnet_forward(s, w1_p, b1_p, w2_p, b2_p, *, block_b=512):
    """s: (B, in_dim) f32; params from prepare_qnet_params.
    Returns q: (B, out_dim) f32."""
    s = s.astype(jnp.float32)
    batch, in_dim = s.shape
    h_dim = w1_p.shape[0]
    out_dim = w2_p.shape[0]

    # Batch tile: full batch if it fits in one block, else block_b rows.
    tb = batch if batch <= block_b else block_b
    if tb < batch and tb % 8 != 0:
        raise ValueError("block_b must be a multiple of 8 when tiling the batch")
    grid = (pl.cdiv(batch, tb),)

    flops = 2 * batch * (in_dim * h_dim + h_dim * out_dim)
    bytes_accessed = (batch * in_dim * 4 + batch * out_dim * 4
                      + h_dim * in_dim * 2 + out_dim * h_dim * 2
                      + h_dim * 4 + out_dim * 4)

    return pl.pallas_call(
        _qnet_kernel,
        out_shape=jax.ShapeDtypeStruct((batch, out_dim), jnp.float32),
        grid=grid,
        in_specs=[
            pl.BlockSpec((tb, in_dim), lambda i: (i, 0)),       # s: tiled batch
            pl.BlockSpec((h_dim, in_dim), lambda i: (0, 0)),    # w1: resident
            pl.BlockSpec((1, h_dim), lambda i: (0, 0)),         # b1: resident
            pl.BlockSpec((out_dim, h_dim), lambda i: (0, 0)),   # w2: resident
            pl.BlockSpec((1, out_dim), lambda i: (0, 0)),       # b2: resident
        ],
        out_specs=pl.BlockSpec((tb, out_dim), lambda i: (i, 0)),
        compiler_params=pltpu.CompilerParams(
            dimension_semantics=("parallel",),
            vmem_limit_bytes=_vmem_budget_bytes(tb, in_dim, h_dim, out_dim)),
        cost_estimate=pl.CostEstimate(
            flops=flops, transcendentals=0, bytes_accessed=bytes_accessed),
    )(s, w1_p, b1_p, w2_p, b2_p)


def init_qnet_params(key, in_dim, out_dim):
    """Deterministic init mirroring nn.Linear shapes:
    fc1: (h_dim=in_dim, in_dim), fc2: (out_dim, h_dim)."""
    h_dim = in_dim
    k1, k2, k3, k4 = jax.random.split(key, 4)
    bound1 = 1.0 / jnp.sqrt(in_dim)
    bound2 = 1.0 / jnp.sqrt(h_dim)
    w1 = jax.random.uniform(k1, (h_dim, in_dim), jnp.float32, -bound1, bound1)
    b1 = jax.random.uniform(k2, (h_dim,), jnp.float32, -bound1, bound1)
    w2 = jax.random.uniform(k3, (out_dim, h_dim), jnp.float32, -bound2, bound2)
    b2 = jax.random.uniform(k4, (out_dim,), jnp.float32, -bound2, bound2)
    return w1, b1, w2, b2


if __name__ == "__main__":
    # CartPole-like feature dims: state dim 4, action dim 2.
    in_dim, out_dim = 4, 2
    key = jax.random.PRNGKey(0)
    k_s, k_s2, k_p = jax.random.split(key, 3)
    w1, b1, w2, b2 = init_qnet_params(k_p, in_dim, out_dim)
    params = prepare_qnet_params(w1, b1, w2, b2)   # one-time, outside hot path

    # (a) Tiled path: batch larger than the block so the grid has >1 step.
    batch = 32
    s = jax.random.normal(k_s, (batch, in_dim), jnp.float32)
    q = jax.block_until_ready(qnet_forward(s, *params, block_b=16))
    q_ref = (s @ w1.T + b1) @ w2.T + b2            # pure-JAX f32 reference
    assert q.shape == (batch, out_dim)
    assert jnp.allclose(q, q_ref, atol=3e-2, rtol=3e-2), "mismatch vs reference"

    # (b) CartPole-sized degenerate case (single tile covers the whole batch).
    s2 = jax.random.normal(k_s2, (2, in_dim), jnp.float32)
    q2 = jax.block_until_ready(qnet_forward(s2, *params))
    q2_ref = (s2 @ w1.T + b1) @ w2.T + b2
    assert q2.shape == (2, out_dim)
    assert jnp.allclose(q2, q2_ref, atol=3e-2, rtol=3e-2), "mismatch vs reference"

    print("KERNEL_OK")
</pallas_src>

<mosaic_0001>
module attributes {stable_mosaic.version = 11 : i64} {
  func.func @_qnet_kernel(%arg0: i32, %arg1: memref<16x4xf32, #tpu.memory_space<vmem>>, %arg2: memref<4x4xbf16, #tpu.memory_space<vmem>>, %arg3: memref<1x4xf32, #tpu.memory_space<vmem>>, %arg4: memref<2x4xbf16, #tpu.memory_space<vmem>>, %arg5: memref<1x2xf32, #tpu.memory_space<vmem>>, %arg6: memref<16x2xf32, #tpu.memory_space<vmem>>) attributes {dimension_semantics = [#tpu.dimension_semantics<parallel>], iteration_bounds = array<i64: 2>, scalar_prefetch = 0 : i64, scratch_operands = 0 : i64, tpu.core_type = #tpu.core_type<tc>, window_params = [{transform_indices = @transform_0, window_bounds = array<i64: 16, 4>}, {pipeline_mode = #tpu.pipeline_mode<synchronous>, transform_indices = @transform_1, window_bounds = array<i64: 4, 4>}, {pipeline_mode = #tpu.pipeline_mode<synchronous>, transform_indices = @transform_2, window_bounds = array<i64: 1, 4>}, {pipeline_mode = #tpu.pipeline_mode<synchronous>, transform_indices = @transform_3, window_bounds = array<i64: 2, 4>}, {pipeline_mode = #tpu.pipeline_mode<synchronous>, transform_indices = @transform_4, window_bounds = array<i64: 1, 2>}, {transform_indices = @transform_5, window_bounds = array<i64: 16, 2>}]} {
    %c0 = arith.constant 0 : index
    %c0_0 = arith.constant 0 : index
    %0 = vector.load %arg1[%c0, %c0_0] : memref<16x4xf32, #tpu.memory_space<vmem>>, vector<16x4xf32>
    %1 = arith.truncf %0 : vector<16x4xf32> to vector<16x4xbf16>
    %c0_1 = arith.constant 0 : index
    %c0_2 = arith.constant 0 : index
    %2 = vector.load %arg2[%c0_1, %c0_2] : memref<4x4xbf16, #tpu.memory_space<vmem>>, vector<4x4xbf16>
    %cst = arith.constant dense<0.000000e+00> : vector<16x4xf32>
    %3 = tpu.matmul %1, %2, %cst {dimension_numbers = #tpu.dot_dimension_numbers<[1], [1], [0], [0], [0, 0, 1, 0], [], []>} : vector<16x4xbf16>, vector<4x4xbf16>, vector<16x4xf32> -> vector<16x4xf32>
    %c0_3 = arith.constant 0 : index
    %c0_4 = arith.constant 0 : index
    %4 = vector.load %arg3[%c0_3, %c0_4] : memref<1x4xf32, #tpu.memory_space<vmem>>, vector<1x4xf32>
    %5 = vector.broadcast %4 : vector<1x4xf32> to vector<16x4xf32>
    %6 = arith.addf %3, %5 : vector<16x4xf32>
    %7 = arith.truncf %6 : vector<16x4xf32> to vector<16x4xbf16>
    %c0_5 = arith.constant 0 : index
    %c0_6 = arith.constant 0 : index
    %8 = vector.load %arg4[%c0_5, %c0_6] : memref<2x4xbf16, #tpu.memory_space<vmem>>, vector<2x4xbf16>
    %cst_7 = arith.constant dense<0.000000e+00> : vector<16x2xf32>
    %9 = tpu.matmul %7, %8, %cst_7 {dimension_numbers = #tpu.dot_dimension_numbers<[1], [1], [0], [0], [0, 0, 1, 0], [], []>} : vector<16x4xbf16>, vector<2x4xbf16>, vector<16x2xf32> -> vector<16x2xf32>
    %c0_8 = arith.constant 0 : index
    %c0_9 = arith.constant 0 : index
    %10 = vector.load %arg5[%c0_8, %c0_9] : memref<1x2xf32, #tpu.memory_space<vmem>>, vector<1x2xf32>
    %11 = vector.broadcast %10 : vector<1x2xf32> to vector<16x2xf32>
    %12 = arith.addf %9, %11 : vector<16x2xf32>
    %c0_10 = arith.constant 0 : index
    %c0_11 = arith.constant 0 : index
    %13 = vector.load %arg6[%c0_10, %c0_11] : memref<16x2xf32, #tpu.memory_space<vmem>>, vector<16x2xf32>
    tpu.vector_store %arg6[%c0_10, %c0_11], %12 {strides = array<i32>} : memref<16x2xf32, #tpu.memory_space<vmem>>, vector<16x2xf32>,
    return
  }
  func.func @transform_0(%arg0: i32) -> (i32, i32) {
    %c0_i32 = arith.constant 0 : i32
    %c0_i32_0 = arith.constant 0 : i32
    return %arg0, %c0_i32 : i32, i32
  }
  func.func @transform_1(%arg0: i32) -> (i32, i32) {
    %c0_i32 = arith.constant 0 : i32
    %c0_i32_0 = arith.constant 0 : i32
    %c0_i32_1 = arith.constant 0 : i32
    return %c0_i32, %c0_i32_0 : i32, i32
  }
  func.func @transform_2(%arg0: i32) -> (i32, i32) {
    %c0_i32 = arith.constant 0 : i32
    %c0_i32_0 = arith.constant 0 : i32
    %c0_i32_1 = arith.constant 0 : i32
    return %c0_i32, %c0_i32_0 : i32, i32
  }
  func.func @transform_3(%arg0: i32) -> (i32, i32) {
    %c0_i32 = arith.constant 0 : i32
    %c0_i32_0 = arith.constant 0 : i32
    %c0_i32_1 = arith.constant 0 : i32
    return %c0_i32, %c0_i32_0 : i32, i32
  }
  func.func @transform_4(%arg0: i32) -> (i32, i32) {
    %c0_i32 = arith.constant 0 : i32
    %c0_i32_0 = arith.constant 0 : i32
    %c0_i32_1 = arith.constant 0 : i32
    return %c0_i32, %c0_i32_0 : i32, i32
  }
  func.func @transform_5(%arg0: i32) -> (i32, i32) {
    %c0_i32 = arith.constant 0 : i32
    %c0_i32_0 = arith.constant 0 : i32
    return %arg0, %c0_i32 : i32, i32
  }
}

</mosaic_0001>

<llo_original>
// kernel: qnet_forward.1
$region0: #{qnet_forward.1}
  #allocation0 [shape = 'u32[]', space=smem, size = 0x4, offset = 0x4, fixed_abs, tag = 'smem constant byte address 0x4 - core index']
  #allocation1 [shape = 'u32[144,128]{1,0:T(1,128)}', space=vmem, size = 0x12000, scoped, tag = 'internal scratch']
  %s0 = inlined_call_operand.vmem [shape: f32[32,4], index: 0, kind: input, shape index: {}]
  %s1 = inlined_call_operand.vmem [shape: bf16[4,4], index: 1, kind: input, shape index: {}]
  %s2 = inlined_call_operand.vmem [shape: f32[1,4], index: 2, kind: input, shape index: {}]
  %s3 = inlined_call_operand.vmem [shape: bf16[2,4], index: 3, kind: input, shape index: {}]
  %s4 = inlined_call_operand.vmem [shape: f32[1,2], index: 4, kind: input, shape index: {}]
  %s5 = inlined_call_operand.vmem [shape: f32[32,2], index: 5, kind: output, shape index: {}]
  %s6 = sld [smem:[#allocation0]]
  $region53: #{qnet_forward.1} parent=0
    _
  %s8 = ssub.s32 1, %s6
  %s9 = scalar_select 0, %s8, %s6
  loop: start=0, step=1, limit=4
  $region2: #{qnet_forward.1} parent=0 // loop_pre_header
    _
  $region3: #{qnet_forward.1} parent=0 // loop_header
    %s11 = sphi 0, %s15
    %p12 = scmp.ge.s32.totalorder %s11, 4
    %s21 = sphi 0, %s23
    %s24 = sphi 0, %s21
    %s25 = sphi 0, %s24
    %s41 = sphi 0, %s25
    %s45 = sphi 0, %s45
    %s47 = sphi 0, %s45
    %s48 = sphi 0, %s47
    %s62 = sphi 0, %s48
    %s66 = sphi 0, %s66
    %s68 = sphi 0, %s66
    %s69 = sphi 0, %s68
    %s83 = sphi 0, %s69
    %s87 = sphi 0, %s87
    %s89 = sphi 0, %s87
    %s90 = sphi 0, %s89
    %s104 = sphi 0, %s90
    %s108 = sphi 0, %s108
    %s110 = sphi 0, %s108
    %s111 = sphi 0, %s110
    %s125 = sphi 0, %s111
    %s131 = sphi 0, %s133
    %s134 = sphi 0, %s131
    %s135 = sphi 0, %s134
    %s151 = sphi 0, %s135
  $region4: #{qnet_forward.1} parent=0 // loop_header_branch
    %14 = sbr.rel (%p12) target = $region8
  $region5: #{qnet_forward.1} parent=0 // loop_body
    %s16 = ssub.s32 %s11, 1
    %s17 = ssub.s32 %s11, 2
    %s18 = sadd.s32 %s11, 1
    %s19 = ssub.s32 %s11, %s18
    %p20 = scmp.eq.s32.totalorder %s19, 0
    %s22 = sadd.s32 %s21, 1
    %s23 = scalar_select %p20, %s21, %s22
    %p26 = pneg %p20
    %p27 = scmp.eq.s32.totalorder %s11, 1
    %p28 = por %p26, %p27
    %p29 = scmp.ne.s32.totalorder %s21, %s24
    %p30 = scmp.eq.s32.totalorder %s11, 0
    %p31 = por %p29, %p30
    %p32 = scmp.ne.s32.totalorder %s21, %s24
    %p33 = scmp.eq.s32.totalorder %s16, 1
    %p34 = por %p32, %p33
    %p35 = scmp.ne.s32.totalorder %s24, %s25
    %p36 = scmp.eq.s32.totalorder %s16, 0
    %p37 = por %p35, %p36
    %p38 = scmp.ne.s32.totalorder %s24, %s25
    %p39 = scmp.eq.s32.totalorder %s17, 1
    %p40 = por %p38, %p39
    %p42 = scmp.ne.s32.totalorder %s25, %s41
    %p43 = scmp.eq.s32.totalorder %s17, 0
    %p44 = por %p42, %p43
    %s46 = sadd.s32 %s45, 1
    %p49 = scmp.eq.s32.totalorder %s11, 1
    %p50 = scmp.ne.s32.totalorder %s45, %s47
    %p51 = scmp.eq.s32.totalorder %s11, 0
    %p52 = por %p50, %p51
    %p53 = scmp.ne.s32.totalorder %s45, %s47
    %p54 = scmp.eq.s32.totalorder %s16, 1
    %p55 = por %p53, %p54
    %p56 = scmp.ne.s32.totalorder %s47, %s48
    %p57 = scmp.eq.s32.totalorder %s16, 0
    %p58 = por %p56, %p57
    %p59 = scmp.ne.s32.totalorder %s47, %s48
    %p60 = scmp.eq.s32.totalorder %s17, 1
    %p61 = por %p59, %p60
    %p63 = scmp.ne.s32.totalorder %s48, %s62
    %p64 = scmp.eq.s32.totalorder %s17, 0
    %p65 = por %p63, %p64
    %s67 = sadd.s32 %s66, 1
    %p70 = scmp.eq.s32.totalorder %s11, 1
    %p71 = scmp.ne.s32.totalorder %s66, %s68
    %p72 = scmp.eq.s32.totalorder %s11, 0
    %p73 = por %p71, %p72
    %p74 = scmp.ne.s32.totalorder %s66, %s68
    %p75 = scmp.eq.s32.totalorder %s16, 1
    %p76 = por %p74, %p75
    %p77 = scmp.ne.s32.totalorder %s68, %s69
    %p78 = scmp.eq.s32.totalorder %s16, 0
    %p79 = por %p77, %p78
    %p80 = scmp.ne.s32.totalorder %s68, %s69
    %p81 = scmp.eq.s32.totalorder %s17, 1
    %p82 = por %p80, %p81
    %p84 = scmp.ne.s32.totalorder %s69, %s83
    %p85 = scmp.eq.s32.totalorder %s17, 0
    %p86 = por %p84, %p85
    %s88 = sadd.s32 %s87, 1
    %p91 = scmp.eq.s32.totalorder %s11, 1
    %p92 = scmp.ne.s32.totalorder %s87, %s89
    %p93 = scmp.eq.s32.totalorder %s11, 0
    %p94 = por %p92, %p93
    %p95 = scmp.ne.s32.totalorder %s87, %s89
    %p96 = scmp.eq.s32.totalorder %s16, 1
    %p97 = por %p95, %p96
    %p98 = scmp.ne.s32.totalorder %s89, %s90
    %p99 = scmp.eq.s32.totalorder %s16, 0
    %p100 = por %p98, %p99
    %p101 = scmp.ne.s32.totalorder %s89, %s90
    %p102 = scmp.eq.s32.totalorder %s17, 1
    %p103 = por %p101, %p102
    %p105 = scmp.ne.s32.totalorder %s90, %s104
    %p106 = scmp.eq.s32.totalorder %s17, 0
    %p107 = por %p105, %p106
    %s109 = sadd.s32 %s108, 1
    %p112 = scmp.eq.s32.totalorder %s11, 1
    %p113 = scmp.ne.s32.totalorder %s108, %s110
    %p114 = scmp.eq.s32.totalorder %s11, 0
    %p115 = por %p113, %p114
    %p116 = scmp.ne.s32.totalorder %s108, %s110
    %p117 = scmp.eq.s32.totalorder %s16, 1
    %p118 = por %p116, %p117
    %p119 = scmp.ne.s32.totalorder %s110, %s111
    %p120 = scmp.eq.s32.totalorder %s16, 0
    %p121 = por %p119, %p120
    %p122 = scmp.ne.s32.totalorder %s110, %s111
    %p123 = scmp.eq.s32.totalorder %s17, 1
    %p124 = por %p122, %p123
    %p126 = scmp.ne.s32.totalorder %s111, %s125
    %p127 = scmp.eq.s32.totalorder %s17, 0
    %p128 = por %p126, %p127
    %s129 = ssub.s32 %s11, %s18
    %p130 = scmp.eq.s32.totalorder %s129, 0
    %s132 = sadd.s32 %s131, 1
    %s133 = scalar_select %p130, %s131, %s132
    %p136 = pneg %p130
    %p137 = scmp.eq.s32.totalorder %s11, 1
    %p138 = por %p136, %p137
    %p139 = scmp.ne.s32.totalorder %s131, %s134
    %p140 = scmp.eq.s32.totalorder %s11, 0
    %p141 = por %p139, %p140
    %p142 = scmp.ne.s32.totalorder %s131, %s134
    %p143 = scmp.eq.s32.totalorder %s16, 1
    %p144 = por %p142, %p143
    %p145 = scmp.ne.s32.totalorder %s134, %s135
    %p146 = scmp.eq.s32.totalorder %s16, 0
    %p147 = por %p145, %p146
    %p148 = scmp.ne.s32.totalorder %s134, %s135
    %p149 = scmp.eq.s32.totalorder %s17, 1
    %p150 = por %p148, %p149
    %p152 = scmp.ne.s32.totalorder %s135, %s151
    %p153 = scmp.eq.s32.totalorder %s17, 0
    %p154 = por %p152, %p153
    %p155 = scmp.le.s32.totalorder 1, %s11
    %p156 = scmp.lt.s32.totalorder %s11, 3
    %p157 = pnand %p155, %p156
    %p158 = pneg %p157
    // Predicated region
    $region9: #{qnet_forward.1} parent=5 // pred_check
      _
    $region10: #{qnet_forward.1} parent=5 // pred_check_branch
      %160 = sbr.rel (%p157) target = $region12
    $region11: #{qnet_forward.1} parent=5 // pred_region
      %s161 = ssub.s32 %s11, 1
      // Predicated region
      $region13: #{qnet_forward.1} parent=11 // pred_check
        %p162 = pneg %p58
      $region14: #{qnet_forward.1} parent=11 // pred_check_branch
        %164 = sbr.rel (%p162) target = $region16
      $region15: #{qnet_forward.1} parent=11 // pred_region
        _
      $region16: #{qnet_forward.1} parent=11 // pred_fallthru
        _
      // Predicated region
      $region17: #{qnet_forward.1} parent=11 // pred_check
        %p165 = pneg %p79
      $region18: #{qnet_forward.1} parent=11 // pred_check_branch
        %167 = sbr.rel (%p165) target = $region20
      $region19: #{qnet_forward.1} parent=11 // pred_region
        _
      $region20: #{qnet_forward.1} parent=11 // pred_fallthru
        _
      // Predicated region
      $region21: #{qnet_forward.1} parent=11 // pred_check
        %p168 = pneg %p100
      $region22: #{qnet_forward.1} parent=11 // pred_check_branch
        %170 = sbr.rel (%p168) target = $region24
      $region23: #{qnet_forward.1} parent=11 // pred_region
        _
      $region24: #{qnet_forward.1} parent=11 // pred_fallthru
        _
      // Predicated region
      $region25: #{qnet_forward.1} parent=11 // pred_check
        %p171 = pneg %p121
      $region26: #{qnet_forward.1} parent=11 // pred_check_branch
        %173 = sbr.rel (%p171) target = $region28
      $region27: #{qnet_forward.1} parent=11 // pred_region
        _
      $region28: #{qnet_forward.1} parent=11 // pred_fallthru
        _
    $region12: #{qnet_forward.1} parent=5 // pred_fallthru
      _
    %p174 = scmp.lt.s32.totalorder %s11, 2
    // Predicated region
    $region29: #{qnet_forward.1} parent=5 // pred_check
      %p175 = pneg %p174
    $region30: #{qnet_forward.1} parent=5 // pred_check_branch
      %177 = sbr.rel (%p175) target = $region32
    $region31: #{qnet_forward.1} parent=5 // pred_region
      // Predicated region
      $region33: #{qnet_forward.1} parent=31 // pred_check
        %p178 = pneg %p31
      $region34: #{qnet_forward.1} parent=31 // pred_check_branch
        %180 = sbr.rel (%p178) target = $region36
      $region35: #{qnet_forward.1} parent=31 // pred_region
        %s181 = smul.u32 2, %s11
        %p182 = scmp.lt.s32.totalorder %s181, 3
        %s183 = scalar_select %p182, %s181, 3
        %s184 = smul.addr %s183, 8
        %s185 = scalar_lea.vmem %s0, %s184
        %s186 = smul.u32 2, %s11
      $region36: #{qnet_forward.1} parent=31 // pred_fallthru
        _
    $region32: #{qnet_forward.1} parent=5 // pred_fallthru
      _
    %p187 = scmp.le.s32.totalorder 1, %s11
    %p188 = scmp.lt.s32.totalorder %s11, 3
    %p189 = pnand %p187, %p188
    %p190 = pneg %p189
    // Predicated region
    $region37: #{qnet_forward.1} parent=5 // pred_check
      _
    $region38: #{qnet_forward.1} parent=5 // pred_check_branch
      %192 = sbr.rel (%p189) target = $region40
    $region39: #{qnet_forward.1} parent=5 // pred_region
      %s193 = ssub.s32 %s11, 1
      %s194 = smul.u32 2, %s16
      %p195 = scmp.lt.s32.totalorder %s194, 3
      %s196 = scalar_select %p195, %s194, 3
      %s197 = smul.addr %s196, 8
      %s198 = scalar_lea.vmem %s0, %s197
      %p199 = pneg %p37
      %p200 = pneg %p34
      %p201 = pneg %p58
      %p202 = pneg %p55
      %p203 = pneg %p79
      %p204 = pneg %p76
      %p205 = pneg %p100
      %p206 = pneg %p97
      %p207 = pneg %p121
      %p208 = pneg %p118
      %p209 = pneg %p147
      %p210 = pneg %p144
      %s211 = smul.u32 2, %s16
      %p212 = scmp.lt.s32.totalorder %s211, 3
      %s213 = scalar_select %p212, %s211, 3
      %s214 = smul.addr %s213, 8
      %s215 = scalar_lea.vmem %s5, %s214
      %s216 = smul.u32 2, %s16
      %p217 = scmp.lt.s32.totalorder %s216, 3
      %s218 = scalar_select %p217, %s216, 3
      %s219 = smul.addr %s218, 8
      %s220 = scalar_lea.vmem %s0, %s219
      %s221 = smul.u32 2, %s16
      %s222 = smul.u32 2, %s16
      %p223 = scmp.lt.s32.totalorder %s222, 3
      %s224 = scalar_select %p223, %s222, 3
      %s225 = smul.addr %s224, 8
      %s226 = scalar_lea.vmem %s5, %s225
      %s227 = smul.u32 2, %s16
      %v229 = vld [vmem:[%s220] sm:$0xff]
      %v230 = vld [vmem:[%s220 + $0x8] sm:$0xff]
      %v231 = vpack.c.bf16 %v230, %v229
      %v232 = vld [vmem:[%s1] sm:$0x3]
      %v233 = vld [vmem:[%s2] sm:$0x1]
      %v235 = vlaneseq
      %v236 = vshrl.u32 %v235, 7
      %v237 = vsub.s32 0, %v236
      %v238 = vrot.slane %v233, %v237
      %vm240 = vcmask 31744
      %v242 = vsel %vm240, %v231, 0
      %v245 = vsel %vm240, %v232, 0
      %247 = vmatprep.subr.bf16.mxu0 0
      %248 = vmatpush1.bf16.xpose.msra.mxu0 %v245
      %249 = vmatprep.subr.bf16.mxu0 0
      %250 = vmatpush1.bf16.xpose.msra.mxu0 0
      %251 = vmatprep.subr.bf16.mxu0 0
      %252 = vmatpush1.bf16.xpose.msra.mxu0 0
      %253 = vmatprep.subr.bf16.mxu0 0
      %254 = vmatpush1.bf16.xpose.msra.mxu0 0
      %255 = vmatprep.subr.bf16.mxu0 0
      %256 = vmatpush1.bf16.xpose.msra.mxu0 0
      %257 = vmatprep.subr.bf16.mxu0 0
      %258 = vmatpush1.bf16.xpose.msra.mxu0 0
      %259 = vmatprep.subr.bf16.mxu0 0
      %260 = vmatpush1.bf16.xpose.msra.mxu0 0
      %261 = vmatprep.subr.bf16.mxu0 0
      %262 = vmatpush1.bf16.xpose.msra.mxu0 0
      %263 = vmatprep.subr.bf16.mxu0 0
      %264 = vmatpush1.bf16.xpose.msra.mxu0 0
      %265 = vmatprep.subr.bf16.mxu0 0
      %266 = vmatpush1.bf16.xpose.msra.mxu0 0
      %267 = vmatprep.subr.bf16.mxu0 0
      %268 = vmatpush1.bf16.xpose.msra.mxu0 0
      %269 = vmatprep.subr.bf16.mxu0 0
      %270 = vmatpush1.bf16.xpose.msra.mxu0 0
      %271 = vmatprep.subr.bf16.mxu0 0
      %272 = vmatpush1.bf16.xpose.msra.mxu0 0
      %273 = vmatprep.subr.bf16.mxu0 0
      %274 = vmatpush1.bf16.xpose.msra.mxu0 0
      %275 = vmatprep.subr.bf16.mxu0 0
      %276 = vmatpush1.bf16.xpose.msra.mxu0 0
      %277 = vmatprep.subr.bf16.mxu0 0
      %278 = vmatpush1.bf16.xpose.msra.mxu0 0
      %279 = vmatprep.mubr.bf16.mxu0 0
      %280 = vmatmul.mubr.bf16.gmra.mrb[0].mxu0 %v242
      %v281 = vpop.f32.mrb[0].mxu0
      %v282 = vadd.f32 %v238, %v281
      %v283 = vpop.f32.mrb[0].mxu0
      %v284 = vpop.f32.mrb[0].mxu0
      %v285 = vadd.f32 %v238, %v284
      %v286 = vpop.f32.mrb[0].mxu0
      %287 = vdwg.mxu0
      %v288 = vpack.c.bf16 %v285, %v282
      %v289 = vld [vmem:[%s3] sm:$0x1]
      %v290 = vld [vmem:[%s4] sm:$0x1]
      %v292 = vlaneseq
      %v293 = vshrl.u32 %v292, 7
      %v294 = vsub.s32 0, %v293
      %v295 = vrot.slane %v290, %v294
      %v298 = vsel %vm240, %v288, 0
      %v301 = vsel %vm240, %v289, 0
      %303 = vmatprep.subr.bf16.mxu0 0
      %304 = vmatpush1.bf16.xpose.msra.mxu0 %v301
      %305 = vmatprep.subr.bf16.mxu0 0
      %306 = vmatpush1.bf16.xpose.msra.mxu0 0
      %307 = vmatprep.subr.bf16.mxu0 0
      %308 = vmatpush1.bf16.xpose.msra.mxu0 0
      %309 = vmatprep.subr.bf16.mxu0 0
      %310 = vmatpush1.bf16.xpose.msra.mxu0 0
      %311 = vmatprep.subr.bf16.mxu0 0
      %312 = vmatpush1.bf16.xpose.msra.mxu0 0
      %313 = vmatprep.subr.bf16.mxu0 0
      %314 = vmatpush1.bf16.xpose.msra.mxu0 0
      %315 = vmatprep.subr.bf16.mxu0 0
      %316 = vmatpush1.bf16.xpose.msra.mxu0 0
      %317 = vmatprep.subr.bf16.mxu0 0
      %318 = vmatpush1.bf16.xpose.msra.mxu0 0
      %319 = vmatprep.subr.bf16.mxu0 0
      %320 = vmatpush1.bf16.xpose.msra.mxu0 0
      %321 = vmatprep.subr.bf16.mxu0 0
      %322 = vmatpush1.bf16.xpose.msra.mxu0 0
      %323 = vmatprep.subr.bf16.mxu0 0
      %324 = vmatpush1.bf16.xpose.msra.mxu0 0
      %325 = vmatprep.subr.bf16.mxu0 0
      %326 = vmatpush1.bf16.xpose.msra.mxu0 0
      %327 = vmatprep.subr.bf16.mxu0 0
      %328 = vmatpush1.bf16.xpose.msra.mxu0 0
      %329 = vmatprep.subr.bf16.mxu0 0
      %330 = vmatpush1.bf16.xpose.msra.mxu0 0
      %331 = vmatprep.subr.bf16.mxu0 0
      %332 = vmatpush1.bf16.xpose.msra.mxu0 0
      %333 = vmatprep.subr.bf16.mxu0 0
      %334 = vmatpush1.bf16.xpose.msra.mxu0 0
      %335 = vmatprep.mubr.bf16.mxu0 0
      %336 = vmatmul.mubr.bf16.gmra.mrb[0].mxu0 %v298
      %v337 = vpop.f32.mrb[0].mxu0
      %v338 = vadd.f32 %v295, %v337
      %v339 = vpop.f32.mrb[0].mxu0
      %v340 = vpop.f32.mrb[0].mxu0
      %v341 = vadd.f32 %v295, %v340
      %v342 = vpop.f32.mrb[0].mxu0
      %343 = vdwg.mxu0
      %vm344 = vcmask 15360
      %345 = vst.msk [vmem:[%s226] sm:$0xff] %vm344, %v338
      %346 = vst.msk [vmem:[%s226 + $0x8] sm:$0xff] %vm344, %v341
      %s347 = smul.u32 2, %s16
      %p348 = scmp.lt.s32.totalorder %s347, 3
      %s349 = scalar_select %p348, %s347, 3
      %s350 = smul.addr %s349, 8
      %s351 = scalar_lea.vmem %s5, %s350
      // Predicated region
      $region41: #{qnet_forward.1} parent=39 // pred_check
        %p352 = pneg %p144
      $region42: #{qnet_forward.1} parent=39 // pred_check_branch
        %354 = sbr.rel (%p352) target = $region44
      $region43: #{qnet_forward.1} parent=39 // pred_region
        %s355 = smul.u32 2, %s16
      $region44: #{qnet_forward.1} parent=39 // pred_fallthru
        _
    $region40: #{qnet_forward.1} parent=5 // pred_fallthru
      _
    %p356 = scmp.le.s32.totalorder 2, %s11
    // Predicated region
    $region45: #{qnet_forward.1} parent=5 // pred_check
      %p357 = pneg %p356
    $region46: #{qnet_forward.1} parent=5 // pred_check_branch
      %359 = sbr.rel (%p357) target = $region48
    $region47: #{qnet_forward.1} parent=5 // pred_region
      %s360 = ssub.s32 %s11, 2
      // Predicated region
      $region49: #{qnet_forward.1} parent=47 // pred_check
        %p361 = pneg %p150
      $region50: #{qnet_forward.1} parent=47 // pred_check_branch
        %363 = sbr.rel (%p361) target = $region52
      $region51: #{qnet_forward.1} parent=47 // pred_region
        %s364 = smul.u32 2, %s17
        %p365 = scmp.lt.s32.totalorder %s364, 3
        %s366 = scalar_select %p365, %s364, 3
        %s367 = smul.addr %s366, 8
        %s368 = scalar_lea.vmem %s5, %s367
      $region52: #{qnet_forward.1} parent=47 // pred_fallthru
        _
    $region48: #{qnet_forward.1} parent=5 // pred_fallthru
      _
  $region6: #{qnet_forward.1} parent=0 // loop_footer
    %s15 = sadd.s32 1, %s11
  $region7: #{qnet_forward.1} parent=0 // loop_footer_branch
    %10 = sbr.rel target = $region3
  $region8: #{qnet_forward.1} parent=0 // loop_exit
    _

</llo_original>
